<compile_context>
chip_gen: v7x
topology: tpu7x:2x2x1
jax: 0.10.0
libtpu: 0.0.40
codegen_flags: <defaults>
</compile_context>

<pallas_src>
import functools

import jax
import jax.numpy as jnp
from jax.experimental import pallas as pl
from jax.experimental.pallas import tpu as pltpu


# ----------------------------- Pallas kernel --------------------------------
def _gram_sse_kernel(x_ref, t_ref, sse_ref, acc_ref, *, gram_scale, wt):
    """One grid step = (part i, W-tile k).

    x_ref  : VMEM (M, wt, fp)  input dtype -- part i, W-tile k of the input
    t_ref  : VMEM (1, M, M)    f32         -- target gram for part i
    sse_ref: VMEM (1, 1, 1)    f32         -- per-part sum of squared errors
    acc_ref: VMEM (M, M)       f32 scratch -- running un-normalized gram
    """
    k = pl.program_id(1)

    @pl.when(k == 0)
    def _init():
        acc_ref[...] = jnp.zeros_like(acc_ref)

    acc = acc_ref[...]
    for w in range(wt):                       # static unroll -> wt MXU matmuls
        xw = x_ref[:, w, :]                   # (M, fp); fed untransposed
        acc = acc + jax.lax.dot_general(
            xw, xw, (((1,), (1,)), ((), ())),
            preferred_element_type=jnp.float32)
    acc_ref[...] = acc

    @pl.when(k == pl.num_programs(1) - 1)
    def _finalize():
        gram = acc_ref[...] * gram_scale      # folds the /2 and the gram denom
        diff = gram - t_ref[0]
        sse_ref[0] = jnp.sum(diff * diff, keepdims=True)   # (1, 1)


def _choose_w_tile(w, m, fp, itemsize, *, max_wt=64,
                   vmem_budget=28 * 1024 * 1024):
    """Largest W-tile (multiple of 8 dividing W, capped for unroll sanity)
    whose double-buffered input block keeps the kernel inside a conservative
    VMEM budget (portable down to v7x's 64 MiB VMEM / 32 MiB scoped)."""
    if w % 8 != 0:
        return w                              # full-dim block is always legal
    fixed = 3 * m * m * 4                     # target (2 bufs) + acc scratch
    x_budget = max(vmem_budget - fixed, 2 * 1024 * 1024)
    best, d = 8, 8
    while d <= min(w, max_wt):
        if w % d == 0 and 2 * m * d * fp * itemsize <= x_budget:
            best = d
        d += 8
    return best


def _style_sse_pallas(x3, targets_stacked, *, fp_block, gram_scale):
    """x3: (M, W, F') input dtype; targets_stacked: (num_t, M, M) f32.
    Returns per-part sum of squared gram errors, shape (num_t,) f32."""
    m, w, _ = x3.shape
    num_t = targets_stacked.shape[0]
    itemsize = jnp.dtype(x3.dtype).itemsize
    wt = _choose_w_tile(w, m, fp_block, itemsize)
    nk = w // wt

    kernel = functools.partial(_gram_sse_kernel,
                               gram_scale=float(gram_scale), wt=wt)

    flops = 2 * num_t * m * m * w * fp_block
    bytes_accessed = (num_t * m * w * fp_block * itemsize
                      + targets_stacked.size * targets_stacked.dtype.itemsize
                      + num_t * 4)

    sse = pl.pallas_call(
        kernel,
        out_shape=jax.ShapeDtypeStruct((num_t, 1, 1), jnp.float32),
        grid_spec=pltpu.PrefetchScalarGridSpec(
            num_scalar_prefetch=0,
            grid=(num_t, nk),
            in_specs=[
                pl.BlockSpec((m, wt, fp_block), lambda i, k: (0, k, i)),
                pl.BlockSpec((1, m, m), lambda i, k: (i, 0, 0)),
            ],
            out_specs=pl.BlockSpec((1, 1, 1), lambda i, k: (i, 0, 0)),
            scratch_shapes=[pltpu.VMEM((m, m), jnp.float32)],
        ),
        compiler_params=pltpu.CompilerParams(
            dimension_semantics=("parallel", "arbitrary"),
            vmem_limit_bytes=32 * 1024 * 1024,
        ),
        cost_estimate=pl.CostEstimate(
            flops=flops, transcendentals=0, bytes_accessed=bytes_accessed),
    )(x3, targets_stacked)
    return sse[:, 0, 0]


# ------------------------------- glue / setup -------------------------------
def gram_matrix_ref(x):
    """Plain-JAX mirror of the PyTorch gram_matrix (target setup + reference)."""
    b, h, w, f = x.shape
    feats = (x / 2.0).reshape(b * h, w * f)
    return (feats @ feats.T) / (b * h * w * f)


@functools.partial(jax.jit, static_argnames=("num_t",))
def _style_loss_forward(x, targets_stacked, weights, *, num_t):
    """Jitted forward hot path: build the part-sliceable view of x (free when
    fp is lane-aligned), run the fused gram+SSE kernel, reduce to the loss."""
    b, h, w, f = x.shape
    fp = f // num_t
    m = b * h

    if num_t > 1 and fp % 128 != 0:
        # Zero-pad each part's channel slice to a lane-aligned width.  Zero
        # columns leave F @ F^T unchanged, so the gram stays exact.
        # TODO(synk): this fallback pays one HBM copy; the aligned path is copy-free.
        fp_block = ((fp + 127) // 128) * 128
        xp = x[..., :num_t * fp].reshape(m, w, num_t, fp)
        xp = jnp.pad(xp, ((0, 0), (0, 0), (0, 0), (0, fp_block - fp)))
        x3 = xp.reshape(m, w, num_t * fp_block)
    else:
        fp_block = fp
        x3 = x.reshape(m, w, f)                # free reshape: merge (B, H)

    # gram_matrix(part) = (x/2)(x/2)^T / (b*h*w*fp) = 0.25/(b*h*w*fp) * x x^T
    gram_scale = 0.25 / float(b * h * w * fp)
    sse = _style_sse_pallas(x3, targets_stacked,
                            fp_block=fp_block, gram_scale=gram_scale)
    return jnp.sum(sse * weights) / jnp.float32(m * m)


class StyleLossByParts:
    """JAX/Pallas port of the PyTorch module (forward hot path in Pallas)."""

    def __init__(self, target_feature, weights):
        self.W = target_feature[0].shape[3]            # last-axis size (torch)
        self.num_t = len(target_feature)
        self.weights = jnp.asarray(weights, jnp.float32)
        fp = self.W // self.num_t
        # Matches the PyTorch source exactly: the target slice is divided by 2
        # BEFORE gram_matrix (which divides by 2 again).
        # TODO(synk): like the port below, assumes W divisible by num_t (the
        # torch floor-division slicing can give uneven parts otherwise).
        self.targets_stacked = jnp.stack(
            [gram_matrix_ref(target_feature[i][..., i * fp:(i + 1) * fp] / 2.0)
             for i in range(self.num_t)],
            axis=0).astype(jnp.float32)
        self.loss = jnp.float32(0.0)

    def __call__(self, x):
        assert x.shape[3] == self.W, "input last-axis size must match target_feature"
        self.loss = _style_loss_forward(x, self.targets_stacked, self.weights,
                                        num_t=self.num_t)
        return x                               # forward returns input unchanged


# --------------------------------- main --------------------------------------
def _reference_loss(x, target_feature, weights, num_t):
    f = target_feature[0].shape[3]
    fp = f // num_t
    targets = [
        gram_matrix_ref(target_feature[i][..., i * fp:(i + 1) * fp] / 2.0)
        for i in range(num_t)
    ]
    gs = [gram_matrix_ref(x[..., i * fp:(i + 1) * fp]) for i in range(num_t)]
    loss = jnp.float32(0.0)
    for i in range(num_t):
        loss = loss + jnp.mean((gs[i] - targets[i]) ** 2) * weights[i]
    return loss


if __name__ == "__main__":
    key = jax.random.PRNGKey(0)
    B, H, W, F = 2, 4, 8, 256       # fp = F // num_t = 128 (lane-aligned part)
    num_t = 2

    keys = jax.random.split(key, num_t + 1)
    target_feature = [
        jax.random.normal(keys[i], (B, H, W, F), jnp.float32)
        for i in range(num_t)
    ]
    weights = jnp.array([0.7, 1.3], dtype=jnp.float32)
    x = jax.random.normal(keys[num_t], (B, H, W, F), jnp.float32)

    module = StyleLossByParts(target_feature, weights)
    out = module(x)
    out = jax.block_until_ready(out)
    loss = jax.block_until_ready(module.loss)

    ref = jax.block_until_ready(_reference_loss(x, target_feature, weights, num_t))

    assert out.shape == x.shape and bool(jnp.all(out == x))
    assert jnp.allclose(loss, ref, rtol=1e-3, atol=1e-6), (loss, ref)
    print("KERNEL_OK")
</pallas_src>

<mosaic_0001>
module attributes {stable_mosaic.version = 11 : i64} {
  func.func @_gram_sse_kernel(%arg0: i32, %arg1: i32, %arg2: memref<8x8x128xf32, #tpu.memory_space<vmem>>, %arg3: memref<1x8x8xf32, #tpu.memory_space<vmem>>, %arg4: memref<1x1x1xf32, #tpu.memory_space<vmem>>, %arg5: memref<8x8xf32, #tpu.memory_space<vmem>>) attributes {dimension_semantics = [#tpu.dimension_semantics<parallel>, #tpu.dimension_semantics<arbitrary>], iteration_bounds = array<i64: 2, 1>, scalar_prefetch = 0 : i64, scratch_operands = 1 : i64, tpu.core_type = #tpu.core_type<tc>, window_params = [{transform_indices = @transform_0, window_bounds = array<i64: 8, 8, 128>}, {transform_indices = @transform_1, window_bounds = array<i64: 1, 8, 8>}, {transform_indices = @transform_2, window_bounds = array<i64: 1, 1, 1>}]} {
    %c0_i32 = arith.constant 0 : i32
    %0 = arith.cmpi eq, %arg1, %c0_i32 : i32
    %1 = arith.extui %0 : i1 to i32
    %c0_i32_0 = arith.constant 0 : i32
    %2 = arith.cmpi ne, %1, %c0_i32_0 : i32
    scf.if %2 {
      %cst_30 = arith.constant 0.000000e+00 : f32
      %40 = vector.broadcast %cst_30 : f32 to vector<8x8xf32>
      %c0_31 = arith.constant 0 : index
      %c0_32 = arith.constant 0 : index
      %41 = vector.load %arg5[%c0_31, %c0_32] : memref<8x8xf32, #tpu.memory_space<vmem>>, vector<8x8xf32>
      tpu.vector_store %arg5[%c0_31, %c0_32], %40 {strides = array<i32>} : memref<8x8xf32, #tpu.memory_space<vmem>>, vector<8x8xf32>,
    } else {
    }
    %c0 = arith.constant 0 : index
    %c0_1 = arith.constant 0 : index
    %3 = vector.load %arg5[%c0, %c0_1] : memref<8x8xf32, #tpu.memory_space<vmem>>, vector<8x8xf32>
    %c0_2 = arith.constant 0 : index
    %c0_3 = arith.constant 0 : index
    %c0_4 = arith.constant 0 : index
    %4 = vector.load %arg2[%c0_2, %c0_3, %c0_4] : memref<8x8x128xf32, #tpu.memory_space<vmem>>, vector<8x1x128xf32>
    %5 = vector.shape_cast %4 : vector<8x1x128xf32> to vector<8x128xf32>
    %cst = arith.constant dense<0.000000e+00> : vector<8x8xf32>
    %6 = tpu.matmul %5, %5, %cst {dimension_numbers = #tpu.dot_dimension_numbers<[1], [1], [0], [0], [0, 0, 1, 0], [], []>} : vector<8x128xf32>, vector<8x128xf32>, vector<8x8xf32> -> vector<8x8xf32>
    %7 = arith.addf %3, %6 : vector<8x8xf32>
    %c0_5 = arith.constant 0 : index
    %c1 = arith.constant 1 : index
    %c0_6 = arith.constant 0 : index
    %8 = vector.load %arg2[%c0_5, %c1, %c0_6] : memref<8x8x128xf32, #tpu.memory_space<vmem>>, vector<8x1x128xf32>
    %9 = vector.shape_cast %8 : vector<8x1x128xf32> to vector<8x128xf32>
    %cst_7 = arith.constant dense<0.000000e+00> : vector<8x8xf32>
    %10 = tpu.matmul %9, %9, %cst_7 {dimension_numbers = #tpu.dot_dimension_numbers<[1], [1], [0], [0], [0, 0, 1, 0], [], []>} : vector<8x128xf32>, vector<8x128xf32>, vector<8x8xf32> -> vector<8x8xf32>
    %11 = arith.addf %7, %10 : vector<8x8xf32>
    %c0_8 = arith.constant 0 : index
    %c2 = arith.constant 2 : index
    %c0_9 = arith.constant 0 : index
    %12 = vector.load %arg2[%c0_8, %c2, %c0_9] : memref<8x8x128xf32, #tpu.memory_space<vmem>>, vector<8x1x128xf32>
    %13 = vector.shape_cast %12 : vector<8x1x128xf32> to vector<8x128xf32>
    %cst_10 = arith.constant dense<0.000000e+00> : vector<8x8xf32>
    %14 = tpu.matmul %13, %13, %cst_10 {dimension_numbers = #tpu.dot_dimension_numbers<[1], [1], [0], [0], [0, 0, 1, 0], [], []>} : vector<8x128xf32>, vector<8x128xf32>, vector<8x8xf32> -> vector<8x8xf32>
    %15 = arith.addf %11, %14 : vector<8x8xf32>
    %c0_11 = arith.constant 0 : index
    %c3 = arith.constant 3 : index
    %c0_12 = arith.constant 0 : index
    %16 = vector.load %arg2[%c0_11, %c3, %c0_12] : memref<8x8x128xf32, #tpu.memory_space<vmem>>, vector<8x1x128xf32>
    %17 = vector.shape_cast %16 : vector<8x1x128xf32> to vector<8x128xf32>
    %cst_13 = arith.constant dense<0.000000e+00> : vector<8x8xf32>
    %18 = tpu.matmul %17, %17, %cst_13 {dimension_numbers = #tpu.dot_dimension_numbers<[1], [1], [0], [0], [0, 0, 1, 0], [], []>} : vector<8x128xf32>, vector<8x128xf32>, vector<8x8xf32> -> vector<8x8xf32>
    %19 = arith.addf %15, %18 : vector<8x8xf32>
    %c0_14 = arith.constant 0 : index
    %c4 = arith.constant 4 : index
    %c0_15 = arith.constant 0 : index
    %20 = vector.load %arg2[%c0_14, %c4, %c0_15] : memref<8x8x128xf32, #tpu.memory_space<vmem>>, vector<8x1x128xf32>
    %21 = vector.shape_cast %20 : vector<8x1x128xf32> to vector<8x128xf32>
    %cst_16 = arith.constant dense<0.000000e+00> : vector<8x8xf32>
    %22 = tpu.matmul %21, %21, %cst_16 {dimension_numbers = #tpu.dot_dimension_numbers<[1], [1], [0], [0], [0, 0, 1, 0], [], []>} : vector<8x128xf32>, vector<8x128xf32>, vector<8x8xf32> -> vector<8x8xf32>
    %23 = arith.addf %19, %22 : vector<8x8xf32>
    %c0_17 = arith.constant 0 : index
    %c5 = arith.constant 5 : index
    %c0_18 = arith.constant 0 : index
    %24 = vector.load %arg2[%c0_17, %c5, %c0_18] : memref<8x8x128xf32, #tpu.memory_space<vmem>>, vector<8x1x128xf32>
    %25 = vector.shape_cast %24 : vector<8x1x128xf32> to vector<8x128xf32>
    %cst_19 = arith.constant dense<0.000000e+00> : vector<8x8xf32>
    %26 = tpu.matmul %25, %25, %cst_19 {dimension_numbers = #tpu.dot_dimension_numbers<[1], [1], [0], [0], [0, 0, 1, 0], [], []>} : vector<8x128xf32>, vector<8x128xf32>, vector<8x8xf32> -> vector<8x8xf32>
    %27 = arith.addf %23, %26 : vector<8x8xf32>
    %c0_20 = arith.constant 0 : index
    %c6 = arith.constant 6 : index
    %c0_21 = arith.constant 0 : index
    %28 = vector.load %arg2[%c0_20, %c6, %c0_21] : memref<8x8x128xf32, #tpu.memory_space<vmem>>, vector<8x1x128xf32>
    %29 = vector.shape_cast %28 : vector<8x1x128xf32> to vector<8x128xf32>
    %cst_22 = arith.constant dense<0.000000e+00> : vector<8x8xf32>
    %30 = tpu.matmul %29, %29, %cst_22 {dimension_numbers = #tpu.dot_dimension_numbers<[1], [1], [0], [0], [0, 0, 1, 0], [], []>} : vector<8x128xf32>, vector<8x128xf32>, vector<8x8xf32> -> vector<8x8xf32>
    %31 = arith.addf %27, %30 : vector<8x8xf32>
    %c0_23 = arith.constant 0 : index
    %c7 = arith.constant 7 : index
    %c0_24 = arith.constant 0 : index
    %32 = vector.load %arg2[%c0_23, %c7, %c0_24] : memref<8x8x128xf32, #tpu.memory_space<vmem>>, vector<8x1x128xf32>
    %33 = vector.shape_cast %32 : vector<8x1x128xf32> to vector<8x128xf32>
    %cst_25 = arith.constant dense<0.000000e+00> : vector<8x8xf32>
    %34 = tpu.matmul %33, %33, %cst_25 {dimension_numbers = #tpu.dot_dimension_numbers<[1], [1], [0], [0], [0, 0, 1, 0], [], []>} : vector<8x128xf32>, vector<8x128xf32>, vector<8x8xf32> -> vector<8x8xf32>
    %35 = arith.addf %31, %34 : vector<8x8xf32>
    %c0_26 = arith.constant 0 : index
    %c0_27 = arith.constant 0 : index
    %36 = vector.load %arg5[%c0_26, %c0_27] : memref<8x8xf32, #tpu.memory_space<vmem>>, vector<8x8xf32>
    tpu.vector_store %arg5[%c0_26, %c0_27], %35 {strides = array<i32>} : memref<8x8xf32, #tpu.memory_space<vmem>>, vector<8x8xf32>,
    %c0_i32_28 = arith.constant 0 : i32
    %37 = arith.cmpi eq, %arg1, %c0_i32_28 : i32
    %38 = arith.extui %37 : i1 to i32
    %c0_i32_29 = arith.constant 0 : i32
    %39 = arith.cmpi ne, %38, %c0_i32_29 : i32
    scf.if %39 {
      %c0_30 = arith.constant 0 : index
      %c0_31 = arith.constant 0 : index
      %40 = vector.load %arg5[%c0_30, %c0_31] : memref<8x8xf32, #tpu.memory_space<vmem>>, vector<8x8xf32>
      %cst_32 = arith.constant 3.05175781E-5 : f32
      %41 = vector.broadcast %cst_32 : f32 to vector<8x8xf32>
      %42 = arith.mulf %40, %41 : vector<8x8xf32>
      %c0_33 = arith.constant 0 : index
      %c0_34 = arith.constant 0 : index
      %c0_35 = arith.constant 0 : index
      %43 = vector.load %arg3[%c0_33, %c0_34, %c0_35] : memref<1x8x8xf32, #tpu.memory_space<vmem>>, vector<1x8x8xf32>
      %44 = vector.shape_cast %43 : vector<1x8x8xf32> to vector<8x8xf32>
      %45 = arith.subf %42, %44 : vector<8x8xf32>
      %46 = arith.mulf %45, %45 : vector<8x8xf32>
      %47 = vector.shape_cast %46 : vector<8x8xf32> to vector<1x8x8xf32>
      %cst_36 = arith.constant dense<0.000000e+00> : vector<1xf32>
      %48 = vector.multi_reduction <add>, %47, %cst_36 [1, 2] : vector<1x8x8xf32> to vector<1xf32>
      %49 = vector.shape_cast %48 : vector<1xf32> to vector<1x1x1xf32>
      %50 = vector.extract %49[0, 0, 0] : f32 from vector<1x1x1xf32>
      %51 = vector.broadcast %50 : f32 to vector<1x1xf32>
      %c0_37 = arith.constant 0 : index
      %c0_38 = arith.constant 0 : index
      %c0_39 = arith.constant 0 : index
      %52 = vector.load %arg4[%c0_37, %c0_38, %c0_39] : memref<1x1x1xf32, #tpu.memory_space<vmem>>, vector<1x1x1xf32>
      %53 = vector.shape_cast %52 : vector<1x1x1xf32> to vector<1x1xf32>
      %54 = vector.shape_cast %51 : vector<1x1xf32> to vector<1x1x1xf32>
      tpu.vector_store %arg4[%c0_37, %c0_38, %c0_39], %54 {strides = array<i32>} : memref<1x1x1xf32, #tpu.memory_space<vmem>>, vector<1x1x1xf32>,
    } else {
    }
    return
  }
  func.func @transform_0(%arg0: i32, %arg1: i32) -> (i32, i32, i32) {
    %c0_i32 = arith.constant 0 : i32
    %c0_i32_0 = arith.constant 0 : i32
    return %c0_i32, %arg1, %arg0 : i32, i32, i32
  }
  func.func @transform_1(%arg0: i32, %arg1: i32) -> (i32, i32, i32) {
    %c0_i32 = arith.constant 0 : i32
    %c0_i32_0 = arith.constant 0 : i32
    %c0_i32_1 = arith.constant 0 : i32
    return %arg0, %c0_i32, %c0_i32_0 : i32, i32, i32
  }
  func.func @transform_2(%arg0: i32, %arg1: i32) -> (i32, i32, i32) {
    %c0_i32 = arith.constant 0 : i32
    %c0_i32_0 = arith.constant 0 : i32
    %c0_i32_1 = arith.constant 0 : i32
    return %arg0, %c0_i32, %c0_i32_0 : i32, i32, i32
  }
}

</mosaic_0001>

<llo_original>
// kernel: _style_loss_forward.1
$region0: #{_style_loss_forward.1}
  #allocation0 [shape = 'u32[]', space=smem, size = 0x4, offset = 0x4, fixed_abs, tag = 'smem constant byte address 0x4 - core index']
  #allocation1 [shape = 'u32[144,128]{1,0:T(1,128)}', space=vmem, size = 0x12000, scoped, tag = 'internal scratch']
  #allocation2 [shape = 'f32[8,8]{1,0:T(8,128)}', space=vmem, size = 0x1000, scoped, tag = 'scratch operand']
  %s0 = inlined_call_operand.hbm [shape: f32[8,8,256], index: 0, kind: input, shape index: {}]
  %s1 = inlined_call_operand.hbm [shape: f32[2,8,8], index: 1, kind: input, shape index: {}]
  %s2 = inlined_call_operand.vmem [shape: f32[2,1,1], index: 2, kind: output, shape index: {}]
  %s3 = sld [smem:[#allocation0]]
  $region57: #{_style_loss_forward.1} parent=0
    _
  %s5 = ssub.s32 1, %s3
  %s6 = scalar_select 0, %s5, %s3
  $region1: #{_style_loss_forward.1} parent=0
    #allocation3 [shape = 'u8[65536]{0}', space=vmem, size = 0x10000, scoped, tag = 'input window, operand 0']
    #allocation4 [shape = 's32[2]{0}', space=sflag, size = 0x8, scoped, tag = 'scoped memory for _style_loss_forward.1']
    #allocation5 [shape = 'u8[8192]{0}', space=vmem, size = 0x2000, scoped, tag = 'input window, operand 1']
    #allocation6 [shape = 's32[2]{0}', space=sflag, size = 0x8, scoped, tag = 'scoped memory for _style_loss_forward.1']
    %7 = vsyncpa [#allocation4], 0
    %s8 = scalar_lea.sflag [#allocation4], 1
    %9 = vsyncpa %s8, 0
    %10 = vsyncpa [#allocation6], 0
    %s11 = scalar_lea.sflag [#allocation6], 1
    %12 = vsyncpa %s11, 0
    loop: start=0, step=1, limit=4
    $region2: #{_style_loss_forward.1} parent=1 // loop_pre_header
      _
    $region3: #{_style_loss_forward.1} parent=1 // loop_header
      %s14 = sphi 0, %s18
      %p15 = scmp.ge.s32.totalorder %s14, 4
      %s21 = sphi 0, %s33
      %s22 = sphi 0, %s29
      %s23 = sphi 0, %s21
      %s24 = sphi 0, %s22
      %s25 = sphi 0, %s23
      %s26 = sphi 0, %s24
      %s38 = sphi 0, %s40
      %s41 = sphi 0, %s38
      %s42 = sphi 0, %s41
      %s58 = sphi 0, %s42
      %s64 = sphi 0, %s66
      %s67 = sphi 0, %s64
      %s68 = sphi 0, %s67
      %s84 = sphi 0, %s68
      %s90 = sphi 0, %s92
      %s93 = sphi 0, %s90
      %s94 = sphi 0, %s93
      %s110 = sphi 0, %s94
    $region4: #{_style_loss_forward.1} parent=1 // loop_header_branch
      %17 = sbr.rel (%p15) target = $region8
    $region5: #{_style_loss_forward.1} parent=1 // loop_body
      %s19 = ssub.s32 %s14, 1
      %s20 = ssub.s32 %s14, 2
      %s27 = sadd.s32 1, %s22
      %p28 = scmp.ge.s32.totalorder %s27, 1
      %s29 = scalar_select %p28, 0, %s27
      %s30 = sadd.s32 1, %s21
      %s31 = scalar_select %p28, %s30, %s21
      %p32 = scmp.ge.s32.totalorder %s31, 2
      %s33 = scalar_select %p32, 0, %s31
      %s34 = ssub.s32 %s22, %s29
      %s35 = ssub.s32 %s21, %s33
      %s36 = sor.u32 %s34, %s35
      %p37 = scmp.eq.s32.totalorder %s36, 0
      %s39 = sadd.s32 %s38, 1
      %s40 = scalar_select %p37, %s38, %s39
      %p43 = pneg %p37
      %p44 = scmp.eq.s32.totalorder %s14, 1
      %p45 = por %p43, %p44
      %p46 = scmp.ne.s32.totalorder %s38, %s41
      %p47 = scmp.eq.s32.totalorder %s14, 0
      %p48 = por %p46, %p47
      %p49 = scmp.ne.s32.totalorder %s38, %s41
      %p50 = scmp.eq.s32.totalorder %s19, 1
      %p51 = por %p49, %p50
      %p52 = scmp.ne.s32.totalorder %s41, %s42
      %p53 = scmp.eq.s32.totalorder %s19, 0
      %p54 = por %p52, %p53
      %p55 = scmp.ne.s32.totalorder %s41, %s42
      %p56 = scmp.eq.s32.totalorder %s20, 1
      %p57 = por %p55, %p56
      %p59 = scmp.ne.s32.totalorder %s42, %s58
      %p60 = scmp.eq.s32.totalorder %s20, 0
      %p61 = por %p59, %p60
      %s62 = ssub.s32 %s21, %s33
      %p63 = scmp.eq.s32.totalorder %s62, 0
      %s65 = sadd.s32 %s64, 1
      %s66 = scalar_select %p63, %s64, %s65
      %p69 = pneg %p63
      %p70 = scmp.eq.s32.totalorder %s14, 1
      %p71 = por %p69, %p70
      %p72 = scmp.ne.s32.totalorder %s64, %s67
      %p73 = scmp.eq.s32.totalorder %s14, 0
      %p74 = por %p72, %p73
      %p75 = scmp.ne.s32.totalorder %s64, %s67
      %p76 = scmp.eq.s32.totalorder %s19, 1
      %p77 = por %p75, %p76
      %p78 = scmp.ne.s32.totalorder %s67, %s68
      %p79 = scmp.eq.s32.totalorder %s19, 0
      %p80 = por %p78, %p79
      %p81 = scmp.ne.s32.totalorder %s67, %s68
      %p82 = scmp.eq.s32.totalorder %s20, 1
      %p83 = por %p81, %p82
      %p85 = scmp.ne.s32.totalorder %s68, %s84
      %p86 = scmp.eq.s32.totalorder %s20, 0
      %p87 = por %p85, %p86
      %s88 = ssub.s32 %s21, %s33
      %p89 = scmp.eq.s32.totalorder %s88, 0
      %s91 = sadd.s32 %s90, 1
      %s92 = scalar_select %p89, %s90, %s91
      %p95 = pneg %p89
      %p96 = scmp.eq.s32.totalorder %s14, 1
      %p97 = por %p95, %p96
      %p98 = scmp.ne.s32.totalorder %s90, %s93
      %p99 = scmp.eq.s32.totalorder %s14, 0
      %p100 = por %p98, %p99
      %p101 = scmp.ne.s32.totalorder %s90, %s93
      %p102 = scmp.eq.s32.totalorder %s19, 1
      %p103 = por %p101, %p102
      %p104 = scmp.ne.s32.totalorder %s93, %s94
      %p105 = scmp.eq.s32.totalorder %s19, 0
      %p106 = por %p104, %p105
      %p107 = scmp.ne.s32.totalorder %s93, %s94
      %p108 = scmp.eq.s32.totalorder %s20, 1
      %p109 = por %p107, %p108
      %p111 = scmp.ne.s32.totalorder %s94, %s110
      %p112 = scmp.eq.s32.totalorder %s20, 0
      %p113 = por %p111, %p112
      %p114 = scmp.le.s32.totalorder 1, %s14
      %p115 = scmp.lt.s32.totalorder %s14, 3
      %p116 = pnand %p114, %p115
      %p117 = pneg %p116
      // Predicated region
      $region9: #{_style_loss_forward.1} parent=5 // pred_check
        _
      $region10: #{_style_loss_forward.1} parent=5 // pred_check_branch
        %119 = sbr.rel (%p116) target = $region12
      $region11: #{_style_loss_forward.1} parent=5 // pred_region
        %s120 = ssub.s32 %s14, 1
      $region12: #{_style_loss_forward.1} parent=5 // pred_fallthru
        _
      %p121 = scmp.lt.s32.totalorder %s14, 2
      // Predicated region
      $region13: #{_style_loss_forward.1} parent=5 // pred_check
        %p122 = pneg %p121
      $region14: #{_style_loss_forward.1} parent=5 // pred_check_branch
        %124 = sbr.rel (%p122) target = $region16
      $region15: #{_style_loss_forward.1} parent=5 // pred_region
        // Predicated region
        $region17: #{_style_loss_forward.1} parent=15 // pred_check
          %p125 = pneg %p48
        $region18: #{_style_loss_forward.1} parent=15 // pred_check_branch
          %127 = sbr.rel (%p125) target = $region20
        $region19: #{_style_loss_forward.1} parent=15 // pred_region
          %s128 = sand.u32 %s38, 1
          %s129 = scalar_lea.sflag [#allocation4], %s128
          %s130 = sand.u32 %s38, 1
          %s131 = smul.addr %s130, 64
          %s132 = scalar_lea.vmem [#allocation3], %s131
          %s134 = ssub.s32 1024, 1024
          %135 = vsyncadd %s129, %s134
          %s136 = smul.addr %s22, 2
          %s137 = sadd.s32 %s21, %s136
          %s138 = smul.addr %s137, 128
          %s139 = scalar_lea.hbm %s0, %s138
          %s140 = sshll.u32 %s132, 4
          %s141 = int_to_ptr.vmem [resolvable:$true] %s140
          %146 = dma.hbm_to_vmem [thread:$0]  %s139, 1024, %s141, %s129, 256, 128, 8
        $region20: #{_style_loss_forward.1} parent=15 // pred_fallthru
          _
        // Predicated region
        $region21: #{_style_loss_forward.1} parent=15 // pred_check
          %p147 = pneg %p74
        $region22: #{_style_loss_forward.1} parent=15 // pred_check_branch
          %149 = sbr.rel (%p147) target = $region24
        $region23: #{_style_loss_forward.1} parent=15 // pred_region
          %s150 = sand.u32 %s64, 1
          %s151 = scalar_lea.sflag [#allocation6], %s150
          %s152 = sand.u32 %s64, 1
          %s153 = smul.addr %s152, 8
          %s154 = scalar_lea.vmem [#allocation5], %s153
          %s156 = ssub.s32 128, 128
          %157 = vsyncadd %s151, %s156
          %s158 = smul.addr %s21, 128
          %s159 = scalar_lea.hbm %s1, %s158
          %s161 = sshll.u32 %s154, 4
          %s162 = int_to_ptr.vmem [resolvable:$true] %s161
          %164 = dma.hbm_to_vmem [thread:$0]  %s159, 128, %s162, %s151
        $region24: #{_style_loss_forward.1} parent=15 // pred_fallthru
          _
      $region16: #{_style_loss_forward.1} parent=5 // pred_fallthru
        _
      %p165 = scmp.le.s32.totalorder 1, %s14
      %p166 = scmp.lt.s32.totalorder %s14, 3
      %p167 = pnand %p165, %p166
      %p168 = pneg %p167
      // Predicated region
      $region25: #{_style_loss_forward.1} parent=5 // pred_check
        _
      $region26: #{_style_loss_forward.1} parent=5 // pred_check_branch
        %170 = sbr.rel (%p167) target = $region28
      $region27: #{_style_loss_forward.1} parent=5 // pred_region
        %s171 = ssub.s32 %s14, 1
        %s172 = sand.u32 %s41, 1
        %s173 = scalar_lea.sflag [#allocation4], %s172
        %s174 = sand.u32 %s41, 1
        %s175 = smul.addr %s174, 64
        %s176 = scalar_lea.vmem [#allocation3], %s175
        // Predicated region
        $region29: #{_style_loss_forward.1} parent=27 // pred_check
          %p177 = pneg %p54
        $region30: #{_style_loss_forward.1} parent=27 // pred_check_branch
          %179 = sbr.rel (%p177) target = $region32
        $region31: #{_style_loss_forward.1} parent=27 // pred_region
          %180 = dma.done %s173, 1024
        $region32: #{_style_loss_forward.1} parent=27 // pred_fallthru
          _
        %s181 = sand.u32 %s67, 1
        %s182 = scalar_lea.sflag [#allocation6], %s181
        %s183 = sand.u32 %s67, 1
        %s184 = smul.addr %s183, 8
        %s185 = scalar_lea.vmem [#allocation5], %s184
        // Predicated region
        $region33: #{_style_loss_forward.1} parent=27 // pred_check
          %p186 = pneg %p80
        $region34: #{_style_loss_forward.1} parent=27 // pred_check_branch
          %188 = sbr.rel (%p186) target = $region36
        $region35: #{_style_loss_forward.1} parent=27 // pred_region
          %189 = dma.done %s182, 128
        $region36: #{_style_loss_forward.1} parent=27 // pred_fallthru
          _
        %s190 = sand.u32 %s41, 1
        %s191 = scalar_lea.sflag [#allocation4], %s190
        %s192 = sand.u32 %s41, 1
        %s193 = smul.addr %s192, 64
        %s194 = scalar_lea.vmem [#allocation3], %s193
        %p195 = pneg %p54
        %p196 = pneg %p51
        %s197 = sand.u32 %s67, 1
        %s198 = scalar_lea.sflag [#allocation6], %s197
        %s199 = sand.u32 %s67, 1
        %s200 = smul.addr %s199, 8
        %s201 = scalar_lea.vmem [#allocation5], %s200
        %p202 = pneg %p80
        %p203 = pneg %p77
        %p204 = pneg %p106
        %p205 = pneg %p103
        %p206 = scmp.lt.s32.totalorder %s23, 1
        %s207 = scalar_select %p206, %s23, 1
        %s208 = scalar_lea.vmem %s2, %s207
        %p209 = scmp.lt.s32.totalorder %s23, 1
        %s210 = scalar_select %p209, %s23, 1
        %s211 = scalar_lea.vmem %s2, %s210
        %p212 = scmp.eq.s32.totalorder %s24, 0
        // Predicated region
        $region37: #{_style_loss_forward.1} parent=27 // pred_check
          %p213 = pneg %p212
        $region38: #{_style_loss_forward.1} parent=27 // pred_check_branch
          %215 = sbr.rel (%p213) target = $region40
        $region39: #{_style_loss_forward.1} parent=27 // pred_region
          %vm216 = vcmask 64512
          %217 = vst.msk [vmem:[#allocation2] sm:$0xff] %vm216, 0.0
        $region40: #{_style_loss_forward.1} parent=27 // pred_fallthru
          _
        %v218 = vld [vmem:[#allocation2] sm:$0xff]
        %v219 = vld [vmem:[%s176] sm:$0x1]
        %v220 = vld [vmem:[%s176 + $0x8] sm:$0x1]
        %v221 = vld [vmem:[%s176 + $0x10] sm:$0x1]
        %v222 = vld [vmem:[%s176 + $0x18] sm:$0x1]
        %v223 = vld [vmem:[%s176 + $0x20] sm:$0x1]
        %v224 = vld [vmem:[%s176 + $0x28] sm:$0x1]
        %v225 = vld [vmem:[%s176 + $0x30] sm:$0x1]
        %v226 = vld [vmem:[%s176 + $0x38] sm:$0x1]
        %v235 = vrot.slane %v220, 7
        %vm236 = vcmask 1041409
        %v237 = vsel %vm236, %v235, %v219
        %v238 = vrot.slane %v221, 6
        %vm239 = vcmask 1042434
        %v240 = vsel %vm239, %v238, %v237
        %v241 = vrot.slane %v222, 5
        %vm242 = vcmask 1043459
        %v243 = vsel %vm242, %v241, %v240
        %v244 = vrot.slane %v223, 4
        %vm245 = vcmask 1044484
        %v246 = vsel %vm245, %v244, %v243
        %v247 = vrot.slane %v224, 3
        %vm248 = vcmask 1045509
        %v249 = vsel %vm248, %v247, %v246
        %v250 = vrot.slane %v225, 2
        %vm251 = vcmask 1046534
        %v252 = vsel %vm251, %v250, %v249
        %v253 = vrot.slane %v226, 1
        %vm254 = vcmask 1047559
        %v255 = vsel %vm254, %v253, %v252
        %257 = vmatprep.subr.mxu0 0.0
        %258 = vmatpush1.xpose.msra.mxu0 %v255
        %259 = vmatprep.subr.mxu0 0.0
        %260 = vmatpush1.xpose.msra.mxu0 0.0
        %261 = vmatprep.subr.mxu0 0.0
        %262 = vmatpush1.xpose.msra.mxu0 0.0
        %263 = vmatprep.subr.mxu0 0.0
        %264 = vmatpush1.xpose.msra.mxu0 0.0
        %265 = vmatprep.subr.mxu0 0.0
        %266 = vmatpush1.xpose.msra.mxu0 0.0
        %267 = vmatprep.subr.mxu0 0.0
        %268 = vmatpush1.xpose.msra.mxu0 0.0
        %269 = vmatprep.subr.mxu0 0.0
        %270 = vmatpush1.xpose.msra.mxu0 0.0
        %271 = vmatprep.subr.mxu0 0.0
        %272 = vmatpush1.xpose.msra.mxu0 0.0
        %273 = vmatprep.subr.mxu0 0.0
        %274 = vmatpush1.xpose.msra.mxu0 0.0
        %275 = vmatprep.subr.mxu0 0.0
        %276 = vmatpush1.xpose.msra.mxu0 0.0
        %277 = vmatprep.subr.mxu0 0.0
        %278 = vmatpush1.xpose.msra.mxu0 0.0
        %279 = vmatprep.subr.mxu0 0.0
        %280 = vmatpush1.xpose.msra.mxu0 0.0
        %281 = vmatprep.subr.mxu0 0.0
        %282 = vmatpush1.xpose.msra.mxu0 0.0
        %283 = vmatprep.subr.mxu0 0.0
        %284 = vmatpush1.xpose.msra.mxu0 0.0
        %285 = vmatprep.subr.mxu0 0.0
        %286 = vmatpush1.xpose.msra.mxu0 0.0
        %287 = vmatprep.subr.mxu0 0.0
        %288 = vmatpush1.xpose.msra.mxu0 0.0
        %289 = vmatprep.subr.mxu0 0.0
        %290 = vmatpush1.xpose.msra.mxu0 0.0
        %291 = vmatprep.subr.mxu0 0.0
        %292 = vmatpush1.xpose.msra.mxu0 0.0
        %293 = vmatprep.subr.mxu0 0.0
        %294 = vmatpush1.xpose.msra.mxu0 0.0
        %295 = vmatprep.subr.mxu0 0.0
        %296 = vmatpush1.xpose.msra.mxu0 0.0
        %297 = vmatprep.subr.mxu0 0.0
        %298 = vmatpush1.xpose.msra.mxu0 0.0
        %299 = vmatprep.subr.mxu0 0.0
        %300 = vmatpush1.xpose.msra.mxu0 0.0
        %301 = vmatprep.subr.mxu0 0.0
        %302 = vmatpush1.xpose.msra.mxu0 0.0
        %303 = vmatprep.subr.mxu0 0.0
        %304 = vmatpush1.xpose.msra.mxu0 0.0
        %305 = vmatprep.subr.mxu0 0.0
        %306 = vmatpush1.xpose.msra.mxu0 0.0
        %307 = vmatprep.subr.mxu0 0.0
        %308 = vmatpush1.xpose.msra.mxu0 0.0
        %309 = vmatprep.subr.mxu0 0.0
        %310 = vmatpush1.xpose.msra.mxu0 0.0
        %311 = vmatprep.subr.mxu0 0.0
        %312 = vmatpush1.xpose.msra.mxu0 0.0
        %313 = vmatprep.subr.mxu0 0.0
        %314 = vmatpush1.xpose.msra.mxu0 0.0
        %315 = vmatprep.subr.mxu0 0.0
        %316 = vmatpush1.xpose.msra.mxu0 0.0
        %317 = vmatprep.subr.mxu0 0.0
        %318 = vmatpush1.xpose.msra.mxu0 0.0
        %319 = vmatprep.subr.mxu0 0.0
        %320 = vmatpush1.xpose.msra.mxu0 0.0
        %321 = vmatprep.mubr.f32.mxu0 0.0
        %322 = vmatmul.mubr.f32.gmra.mrb[0].mxu0 %v255
        %v323 = vpop.f32.mrb[0].mxu0
        %v324 = vadd.f32 0.0, %v323
        %v325 = vpop.f32.mrb[0].mxu0
        %326 = vdwg.mxu0
        %v327 = vadd.f32 %v218, %v324
        %v328 = vld [vmem:[%s176 + $0x1] sm:$0x1]
        %v329 = vld [vmem:[%s176 + $0x9] sm:$0x1]
        %v330 = vld [vmem:[%s176 + $0x11] sm:$0x1]
        %v331 = vld [vmem:[%s176 + $0x19] sm:$0x1]
        %v332 = vld [vmem:[%s176 + $0x21] sm:$0x1]
        %v333 = vld [vmem:[%s176 + $0x29] sm:$0x1]
        %v334 = vld [vmem:[%s176 + $0x31] sm:$0x1]
        %v335 = vld [vmem:[%s176 + $0x39] sm:$0x1]
        %v344 = vrot.slane %v329, 7
        %v345 = vsel %vm236, %v344, %v328
        %v346 = vrot.slane %v330, 6
        %v347 = vsel %vm239, %v346, %v345
        %v348 = vrot.slane %v331, 5
        %v349 = vsel %vm242, %v348, %v347
        %v350 = vrot.slane %v332, 4
        %v351 = vsel %vm245, %v350, %v349
        %v352 = vrot.slane %v333, 3
        %v353 = vsel %vm248, %v352, %v351
        %v354 = vrot.slane %v334, 2
        %v355 = vsel %vm251, %v354, %v353
        %v356 = vrot.slane %v335, 1
        %v357 = vsel %vm254, %v356, %v355
        %359 = vmatprep.subr.mxu0 0.0
        %360 = vmatpush1.xpose.msra.mxu0 %v357
        %361 = vmatprep.subr.mxu0 0.0
        %362 = vmatpush1.xpose.msra.mxu0 0.0
        %363 = vmatprep.subr.mxu0 0.0
        %364 = vmatpush1.xpose.msra.mxu0 0.0
        %365 = vmatprep.subr.mxu0 0.0
        %366 = vmatpush1.xpose.msra.mxu0 0.0
        %367 = vmatprep.subr.mxu0 0.0
        %368 = vmatpush1.xpose.msra.mxu0 0.0
        %369 = vmatprep.subr.mxu0 0.0
        %370 = vmatpush1.xpose.msra.mxu0 0.0
        %371 = vmatprep.subr.mxu0 0.0
        %372 = vmatpush1.xpose.msra.mxu0 0.0
        %373 = vmatprep.subr.mxu0 0.0
        %374 = vmatpush1.xpose.msra.mxu0 0.0
        %375 = vmatprep.subr.mxu0 0.0
        %376 = vmatpush1.xpose.msra.mxu0 0.0
        %377 = vmatprep.subr.mxu0 0.0
        %378 = vmatpush1.xpose.msra.mxu0 0.0
        %379 = vmatprep.subr.mxu0 0.0
        %380 = vmatpush1.xpose.msra.mxu0 0.0
        %381 = vmatprep.subr.mxu0 0.0
        %382 = vmatpush1.xpose.msra.mxu0 0.0
        %383 = vmatprep.subr.mxu0 0.0
        %384 = vmatpush1.xpose.msra.mxu0 0.0
        %385 = vmatprep.subr.mxu0 0.0
        %386 = vmatpush1.xpose.msra.mxu0 0.0
        %387 = vmatprep.subr.mxu0 0.0
        %388 = vmatpush1.xpose.msra.mxu0 0.0
        %389 = vmatprep.subr.mxu0 0.0
        %390 = vmatpush1.xpose.msra.mxu0 0.0
        %391 = vmatprep.subr.mxu0 0.0
        %392 = vmatpush1.xpose.msra.mxu0 0.0
        %393 = vmatprep.subr.mxu0 0.0
        %394 = vmatpush1.xpose.msra.mxu0 0.0
        %395 = vmatprep.subr.mxu0 0.0
        %396 = vmatpush1.xpose.msra.mxu0 0.0
        %397 = vmatprep.subr.mxu0 0.0
        %398 = vmatpush1.xpose.msra.mxu0 0.0
        %399 = vmatprep.subr.mxu0 0.0
        %400 = vmatpush1.xpose.msra.mxu0 0.0
        %401 = vmatprep.subr.mxu0 0.0
        %402 = vmatpush1.xpose.msra.mxu0 0.0
        %403 = vmatprep.subr.mxu0 0.0
        %404 = vmatpush1.xpose.msra.mxu0 0.0
        %405 = vmatprep.subr.mxu0 0.0
        %406 = vmatpush1.xpose.msra.mxu0 0.0
        %407 = vmatprep.subr.mxu0 0.0
        %408 = vmatpush1.xpose.msra.mxu0 0.0
        %409 = vmatprep.subr.mxu0 0.0
        %410 = vmatpush1.xpose.msra.mxu0 0.0
        %411 = vmatprep.subr.mxu0 0.0
        %412 = vmatpush1.xpose.msra.mxu0 0.0
        %413 = vmatprep.subr.mxu0 0.0
        %414 = vmatpush1.xpose.msra.mxu0 0.0
        %415 = vmatprep.subr.mxu0 0.0
        %416 = vmatpush1.xpose.msra.mxu0 0.0
        %417 = vmatprep.subr.mxu0 0.0
        %418 = vmatpush1.xpose.msra.mxu0 0.0
        %419 = vmatprep.subr.mxu0 0.0
        %420 = vmatpush1.xpose.msra.mxu0 0.0
        %421 = vmatprep.subr.mxu0 0.0
        %422 = vmatpush1.xpose.msra.mxu0 0.0
        %423 = vmatprep.mubr.f32.mxu0 0.0
        %424 = vmatmul.mubr.f32.gmra.mrb[0].mxu0 %v357
        %v425 = vpop.f32.mrb[0].mxu0
        %v426 = vadd.f32 0.0, %v425
        %v427 = vpop.f32.mrb[0].mxu0
        %428 = vdwg.mxu0
        %v429 = vadd.f32 %v327, %v426
        %v430 = vld [vmem:[%s176 + $0x2] sm:$0x1]
        %v431 = vld [vmem:[%s176 + $0xa] sm:$0x1]
        %v432 = vld [vmem:[%s176 + $0x12] sm:$0x1]
        %v433 = vld [vmem:[%s176 + $0x1a] sm:$0x1]
        %v434 = vld [vmem:[%s176 + $0x22] sm:$0x1]
        %v435 = vld [vmem:[%s176 + $0x2a] sm:$0x1]
        %v436 = vld [vmem:[%s176 + $0x32] sm:$0x1]
        %v437 = vld [vmem:[%s176 + $0x3a] sm:$0x1]
        %v446 = vrot.slane %v431, 7
        %v447 = vsel %vm236, %v446, %v430
        %v448 = vrot.slane %v432, 6
        %v449 = vsel %vm239, %v448, %v447
        %v450 = vrot.slane %v433, 5
        %v451 = vsel %vm242, %v450, %v449
        %v452 = vrot.slane %v434, 4
        %v453 = vsel %vm245, %v452, %v451
        %v454 = vrot.slane %v435, 3
        %v455 = vsel %vm248, %v454, %v453
        %v456 = vrot.slane %v436, 2
        %v457 = vsel %vm251, %v456, %v455
        %v458 = vrot.slane %v437, 1
        %v459 = vsel %vm254, %v458, %v457
        %461 = vmatprep.subr.mxu0 0.0
        %462 = vmatpush1.xpose.msra.mxu0 %v459
        %463 = vmatprep.subr.mxu0 0.0
        %464 = vmatpush1.xpose.msra.mxu0 0.0
        %465 = vmatprep.subr.mxu0 0.0
        %466 = vmatpush1.xpose.msra.mxu0 0.0
        %467 = vmatprep.subr.mxu0 0.0
        %468 = vmatpush1.xpose.msra.mxu0 0.0
        %469 = vmatprep.subr.mxu0 0.0
        %470 = vmatpush1.xpose.msra.mxu0 0.0
        %471 = vmatprep.subr.mxu0 0.0
        %472 = vmatpush1.xpose.msra.mxu0 0.0
        %473 = vmatprep.subr.mxu0 0.0
        %474 = vmatpush1.xpose.msra.mxu0 0.0
        %475 = vmatprep.subr.mxu0 0.0
        %476 = vmatpush1.xpose.msra.mxu0 0.0
        %477 = vmatprep.subr.mxu0 0.0
        %478 = vmatpush1.xpose.msra.mxu0 0.0
        %479 = vmatprep.subr.mxu0 0.0
        %480 = vmatpush1.xpose.msra.mxu0 0.0
        %481 = vmatprep.subr.mxu0 0.0
        %482 = vmatpush1.xpose.msra.mxu0 0.0
        %483 = vmatprep.subr.mxu0 0.0
        %484 = vmatpush1.xpose.msra.mxu0 0.0
        %485 = vmatprep.subr.mxu0 0.0
        %486 = vmatpush1.xpose.msra.mxu0 0.0
        %487 = vmatprep.subr.mxu0 0.0
        %488 = vmatpush1.xpose.msra.mxu0 0.0
        %489 = vmatprep.subr.mxu0 0.0
        %490 = vmatpush1.xpose.msra.mxu0 0.0
        %491 = vmatprep.subr.mxu0 0.0
        %492 = vmatpush1.xpose.msra.mxu0 0.0
        %493 = vmatprep.subr.mxu0 0.0
        %494 = vmatpush1.xpose.msra.mxu0 0.0
        %495 = vmatprep.subr.mxu0 0.0
        %496 = vmatpush1.xpose.msra.mxu0 0.0
        %497 = vmatprep.subr.mxu0 0.0
        %498 = vmatpush1.xpose.msra.mxu0 0.0
        %499 = vmatprep.subr.mxu0 0.0
        %500 = vmatpush1.xpose.msra.mxu0 0.0
        %501 = vmatprep.subr.mxu0 0.0
        %502 = vmatpush1.xpose.msra.mxu0 0.0
        %503 = vmatprep.subr.mxu0 0.0
        %504 = vmatpush1.xpose.msra.mxu0 0.0
        %505 = vmatprep.subr.mxu0 0.0
        %506 = vmatpush1.xpose.msra.mxu0 0.0
        %507 = vmatprep.subr.mxu0 0.0
        %508 = vmatpush1.xpose.msra.mxu0 0.0
        %509 = vmatprep.subr.mxu0 0.0
        %510 = vmatpush1.xpose.msra.mxu0 0.0
        %511 = vmatprep.subr.mxu0 0.0
        %512 = vmatpush1.xpose.msra.mxu0 0.0
        %513 = vmatprep.subr.mxu0 0.0
        %514 = vmatpush1.xpose.msra.mxu0 0.0
        %515 = vmatprep.subr.mxu0 0.0
        %516 = vmatpush1.xpose.msra.mxu0 0.0
        %517 = vmatprep.subr.mxu0 0.0
        %518 = vmatpush1.xpose.msra.mxu0 0.0
        %519 = vmatprep.subr.mxu0 0.0
        %520 = vmatpush1.xpose.msra.mxu0 0.0
        %521 = vmatprep.subr.mxu0 0.0
        %522 = vmatpush1.xpose.msra.mxu0 0.0
        %523 = vmatprep.subr.mxu0 0.0
        %524 = vmatpush1.xpose.msra.mxu0 0.0
        %525 = vmatprep.mubr.f32.mxu0 0.0
        %526 = vmatmul.mubr.f32.gmra.mrb[0].mxu0 %v459
        %v527 = vpop.f32.mrb[0].mxu0
        %v528 = vadd.f32 0.0, %v527
        %v529 = vpop.f32.mrb[0].mxu0
        %530 = vdwg.mxu0
        %v531 = vadd.f32 %v429, %v528
        %v532 = vld [vmem:[%s176 + $0x3] sm:$0x1]
        %v533 = vld [vmem:[%s176 + $0xb] sm:$0x1]
        %v534 = vld [vmem:[%s176 + $0x13] sm:$0x1]
        %v535 = vld [vmem:[%s176 + $0x1b] sm:$0x1]
        %v536 = vld [vmem:[%s176 + $0x23] sm:$0x1]
        %v537 = vld [vmem:[%s176 + $0x2b] sm:$0x1]
        %v538 = vld [vmem:[%s176 + $0x33] sm:$0x1]
        %v539 = vld [vmem:[%s176 + $0x3b] sm:$0x1]
        %v548 = vrot.slane %v533, 7
        %v549 = vsel %vm236, %v548, %v532
        %v550 = vrot.slane %v534, 6
        %v551 = vsel %vm239, %v550, %v549
        %v552 = vrot.slane %v535, 5
        %v553 = vsel %vm242, %v552, %v551
        %v554 = vrot.slane %v536, 4
        %v555 = vsel %vm245, %v554, %v553
        %v556 = vrot.slane %v537, 3
        %v557 = vsel %vm248, %v556, %v555
        %v558 = vrot.slane %v538, 2
        %v559 = vsel %vm251, %v558, %v557
        %v560 = vrot.slane %v539, 1
        %v561 = vsel %vm254, %v560, %v559
        %563 = vmatprep.subr.mxu0 0.0
        %564 = vmatpush1.xpose.msra.mxu0 %v561
        %565 = vmatprep.subr.mxu0 0.0
        %566 = vmatpush1.xpose.msra.mxu0 0.0
        %567 = vmatprep.subr.mxu0 0.0
        %568 = vmatpush1.xpose.msra.mxu0 0.0
        %569 = vmatprep.subr.mxu0 0.0
        %570 = vmatpush1.xpose.msra.mxu0 0.0
        %571 = vmatprep.subr.mxu0 0.0
        %572 = vmatpush1.xpose.msra.mxu0 0.0
        %573 = vmatprep.subr.mxu0 0.0
        %574 = vmatpush1.xpose.msra.mxu0 0.0
        %575 = vmatprep.subr.mxu0 0.0
        %576 = vmatpush1.xpose.msra.mxu0 0.0
        %577 = vmatprep.subr.mxu0 0.0
        %578 = vmatpush1.xpose.msra.mxu0 0.0
        %579 = vmatprep.subr.mxu0 0.0
        %580 = vmatpush1.xpose.msra.mxu0 0.0
        %581 = vmatprep.subr.mxu0 0.0
        %582 = vmatpush1.xpose.msra.mxu0 0.0
        %583 = vmatprep.subr.mxu0 0.0
        %584 = vmatpush1.xpose.msra.mxu0 0.0
        %585 = vmatprep.subr.mxu0 0.0
        %586 = vmatpush1.xpose.msra.mxu0 0.0
        %587 = vmatprep.subr.mxu0 0.0
        %588 = vmatpush1.xpose.msra.mxu0 0.0
        %589 = vmatprep.subr.mxu0 0.0
        %590 = vmatpush1.xpose.msra.mxu0 0.0
        %591 = vmatprep.subr.mxu0 0.0
        %592 = vmatpush1.xpose.msra.mxu0 0.0
        %593 = vmatprep.subr.mxu0 0.0
        %594 = vmatpush1.xpose.msra.mxu0 0.0
        %595 = vmatprep.subr.mxu0 0.0
        %596 = vmatpush1.xpose.msra.mxu0 0.0
        %597 = vmatprep.subr.mxu0 0.0
        %598 = vmatpush1.xpose.msra.mxu0 0.0
        %599 = vmatprep.subr.mxu0 0.0
        %600 = vmatpush1.xpose.msra.mxu0 0.0
        %601 = vmatprep.subr.mxu0 0.0
        %602 = vmatpush1.xpose.msra.mxu0 0.0
        %603 = vmatprep.subr.mxu0 0.0
        %604 = vmatpush1.xpose.msra.mxu0 0.0
        %605 = vmatprep.subr.mxu0 0.0
        %606 = vmatpush1.xpose.msra.mxu0 0.0
        %607 = vmatprep.subr.mxu0 0.0
        %608 = vmatpush1.xpose.msra.mxu0 0.0
        %609 = vmatprep.subr.mxu0 0.0
        %610 = vmatpush1.xpose.msra.mxu0 0.0
        %611 = vmatprep.subr.mxu0 0.0
        %612 = vmatpush1.xpose.msra.mxu0 0.0
        %613 = vmatprep.subr.mxu0 0.0
        %614 = vmatpush1.xpose.msra.mxu0 0.0
        %615 = vmatprep.subr.mxu0 0.0
        %616 = vmatpush1.xpose.msra.mxu0 0.0
        %617 = vmatprep.subr.mxu0 0.0
        %618 = vmatpush1.xpose.msra.mxu0 0.0
        %619 = vmatprep.subr.mxu0 0.0
        %620 = vmatpush1.xpose.msra.mxu0 0.0
        %621 = vmatprep.subr.mxu0 0.0
        %622 = vmatpush1.xpose.msra.mxu0 0.0
        %623 = vmatprep.subr.mxu0 0.0
        %624 = vmatpush1.xpose.msra.mxu0 0.0
        %625 = vmatprep.subr.mxu0 0.0
        %626 = vmatpush1.xpose.msra.mxu0 0.0
        %627 = vmatprep.mubr.f32.mxu0 0.0
        %628 = vmatmul.mubr.f32.gmra.mrb[0].mxu0 %v561
        %v629 = vpop.f32.mrb[0].mxu0
        %v630 = vadd.f32 0.0, %v629
        %v631 = vpop.f32.mrb[0].mxu0
        %632 = vdwg.mxu0
        %v633 = vadd.f32 %v531, %v630
        %v634 = vld [vmem:[%s176 + $0x4] sm:$0x1]
        %v635 = vld [vmem:[%s176 + $0xc] sm:$0x1]
        %v636 = vld [vmem:[%s176 + $0x14] sm:$0x1]
        %v637 = vld [vmem:[%s176 + $0x1c] sm:$0x1]
        %v638 = vld [vmem:[%s176 + $0x24] sm:$0x1]
        %v639 = vld [vmem:[%s176 + $0x2c] sm:$0x1]
        %v640 = vld [vmem:[%s176 + $0x34] sm:$0x1]
        %v641 = vld [vmem:[%s176 + $0x3c] sm:$0x1]
        %v650 = vrot.slane %v635, 7
        %v651 = vsel %vm236, %v650, %v634
        %v652 = vrot.slane %v636, 6
        %v653 = vsel %vm239, %v652, %v651
        %v654 = vrot.slane %v637, 5
        %v655 = vsel %vm242, %v654, %v653
        %v656 = vrot.slane %v638, 4
        %v657 = vsel %vm245, %v656, %v655
        %v658 = vrot.slane %v639, 3
        %v659 = vsel %vm248, %v658, %v657
        %v660 = vrot.slane %v640, 2
        %v661 = vsel %vm251, %v660, %v659
        %v662 = vrot.slane %v641, 1
        %v663 = vsel %vm254, %v662, %v661
        %665 = vmatprep.subr.mxu0 0.0
        %666 = vmatpush1.xpose.msra.mxu0 %v663
        %667 = vmatprep.subr.mxu0 0.0
        %668 = vmatpush1.xpose.msra.mxu0 0.0
        %669 = vmatprep.subr.mxu0 0.0
        %670 = vmatpush1.xpose.msra.mxu0 0.0
        %671 = vmatprep.subr.mxu0 0.0
        %672 = vmatpush1.xpose.msra.mxu0 0.0
        %673 = vmatprep.subr.mxu0 0.0
        %674 = vmatpush1.xpose.msra.mxu0 0.0
        %675 = vmatprep.subr.mxu0 0.0
        %676 = vmatpush1.xpose.msra.mxu0 0.0
        %677 = vmatprep.subr.mxu0 0.0
        %678 = vmatpush1.xpose.msra.mxu0 0.0
        %679 = vmatprep.subr.mxu0 0.0
        %680 = vmatpush1.xpose.msra.mxu0 0.0
        %681 = vmatprep.subr.mxu0 0.0
        %682 = vmatpush1.xpose.msra.mxu0 0.0
        %683 = vmatprep.subr.mxu0 0.0
        %684 = vmatpush1.xpose.msra.mxu0 0.0
        %685 = vmatprep.subr.mxu0 0.0
        %686 = vmatpush1.xpose.msra.mxu0 0.0
        %687 = vmatprep.subr.mxu0 0.0
        %688 = vmatpush1.xpose.msra.mxu0 0.0
        %689 = vmatprep.subr.mxu0 0.0
        %690 = vmatpush1.xpose.msra.mxu0 0.0
        %691 = vmatprep.subr.mxu0 0.0
        %692 = vmatpush1.xpose.msra.mxu0 0.0
        %693 = vmatprep.subr.mxu0 0.0
        %694 = vmatpush1.xpose.msra.mxu0 0.0
        %695 = vmatprep.subr.mxu0 0.0
        %696 = vmatpush1.xpose.msra.mxu0 0.0
        %697 = vmatprep.subr.mxu0 0.0
        %698 = vmatpush1.xpose.msra.mxu0 0.0
        %699 = vmatprep.subr.mxu0 0.0
        %700 = vmatpush1.xpose.msra.mxu0 0.0
        %701 = vmatprep.subr.mxu0 0.0
        %702 = vmatpush1.xpose.msra.mxu0 0.0
        %703 = vmatprep.subr.mxu0 0.0
        %704 = vmatpush1.xpose.msra.mxu0 0.0
        %705 = vmatprep.subr.mxu0 0.0
        %706 = vmatpush1.xpose.msra.mxu0 0.0
        %707 = vmatprep.subr.mxu0 0.0
        %708 = vmatpush1.xpose.msra.mxu0 0.0
        %709 = vmatprep.subr.mxu0 0.0
        %710 = vmatpush1.xpose.msra.mxu0 0.0
        %711 = vmatprep.subr.mxu0 0.0
        %712 = vmatpush1.xpose.msra.mxu0 0.0
        %713 = vmatprep.subr.mxu0 0.0
        %714 = vmatpush1.xpose.msra.mxu0 0.0
        %715 = vmatprep.subr.mxu0 0.0
        %716 = vmatpush1.xpose.msra.mxu0 0.0
        %717 = vmatprep.subr.mxu0 0.0
        %718 = vmatpush1.xpose.msra.mxu0 0.0
        %719 = vmatprep.subr.mxu0 0.0
        %720 = vmatpush1.xpose.msra.mxu0 0.0
        %721 = vmatprep.subr.mxu0 0.0
        %722 = vmatpush1.xpose.msra.mxu0 0.0
        %723 = vmatprep.subr.mxu0 0.0
        %724 = vmatpush1.xpose.msra.mxu0 0.0
        %725 = vmatprep.subr.mxu0 0.0
        %726 = vmatpush1.xpose.msra.mxu0 0.0
        %727 = vmatprep.subr.mxu0 0.0
        %728 = vmatpush1.xpose.msra.mxu0 0.0
        %729 = vmatprep.mubr.f32.mxu0 0.0
        %730 = vmatmul.mubr.f32.gmra.mrb[0].mxu0 %v663
        %v731 = vpop.f32.mrb[0].mxu0
        %v732 = vadd.f32 0.0, %v731
        %v733 = vpop.f32.mrb[0].mxu0
        %734 = vdwg.mxu0
        %v735 = vadd.f32 %v633, %v732
        %v736 = vld [vmem:[%s176 + $0x5] sm:$0x1]
        %v737 = vld [vmem:[%s176 + $0xd] sm:$0x1]
        %v738 = vld [vmem:[%s176 + $0x15] sm:$0x1]
        %v739 = vld [vmem:[%s176 + $0x1d] sm:$0x1]
        %v740 = vld [vmem:[%s176 + $0x25] sm:$0x1]
        %v741 = vld [vmem:[%s176 + $0x2d] sm:$0x1]
        %v742 = vld [vmem:[%s176 + $0x35] sm:$0x1]
        %v743 = vld [vmem:[%s176 + $0x3d] sm:$0x1]
        %v752 = vrot.slane %v737, 7
        %v753 = vsel %vm236, %v752, %v736
        %v754 = vrot.slane %v738, 6
        %v755 = vsel %vm239, %v754, %v753
        %v756 = vrot.slane %v739, 5
        %v757 = vsel %vm242, %v756, %v755
        %v758 = vrot.slane %v740, 4
        %v759 = vsel %vm245, %v758, %v757
        %v760 = vrot.slane %v741, 3
        %v761 = vsel %vm248, %v760, %v759
        %v762 = vrot.slane %v742, 2
        %v763 = vsel %vm251, %v762, %v761
        %v764 = vrot.slane %v743, 1
        %v765 = vsel %vm254, %v764, %v763
        %767 = vmatprep.subr.mxu0 0.0
        %768 = vmatpush1.xpose.msra.mxu0 %v765
        %769 = vmatprep.subr.mxu0 0.0
        %770 = vmatpush1.xpose.msra.mxu0 0.0
        %771 = vmatprep.subr.mxu0 0.0
        %772 = vmatpush1.xpose.msra.mxu0 0.0
        %773 = vmatprep.subr.mxu0 0.0
        %774 = vmatpush1.xpose.msra.mxu0 0.0
        %775 = vmatprep.subr.mxu0 0.0
        %776 = vmatpush1.xpose.msra.mxu0 0.0
        %777 = vmatprep.subr.mxu0 0.0
        %778 = vmatpush1.xpose.msra.mxu0 0.0
        %779 = vmatprep.subr.mxu0 0.0
        %780 = vmatpush1.xpose.msra.mxu0 0.0
        %781 = vmatprep.subr.mxu0 0.0
        %782 = vmatpush1.xpose.msra.mxu0 0.0
        %783 = vmatprep.subr.mxu0 0.0
        %784 = vmatpush1.xpose.msra.mxu0 0.0
        %785 = vmatprep.subr.mxu0 0.0
        %786 = vmatpush1.xpose.msra.mxu0 0.0
        %787 = vmatprep.subr.mxu0 0.0
        %788 = vmatpush1.xpose.msra.mxu0 0.0
        %789 = vmatprep.subr.mxu0 0.0
        %790 = vmatpush1.xpose.msra.mxu0 0.0
        %791 = vmatprep.subr.mxu0 0.0
        %792 = vmatpush1.xpose.msra.mxu0 0.0
        %793 = vmatprep.subr.mxu0 0.0
        %794 = vmatpush1.xpose.msra.mxu0 0.0
        %795 = vmatprep.subr.mxu0 0.0
        %796 = vmatpush1.xpose.msra.mxu0 0.0
        %797 = vmatprep.subr.mxu0 0.0
        %798 = vmatpush1.xpose.msra.mxu0 0.0
        %799 = vmatprep.subr.mxu0 0.0
        %800 = vmatpush1.xpose.msra.mxu0 0.0
        %801 = vmatprep.subr.mxu0 0.0
        %802 = vmatpush1.xpose.msra.mxu0 0.0
        %803 = vmatprep.subr.mxu0 0.0
        %804 = vmatpush1.xpose.msra.mxu0 0.0
        %805 = vmatprep.subr.mxu0 0.0
        %806 = vmatpush1.xpose.msra.mxu0 0.0
        %807 = vmatprep.subr.mxu0 0.0
        %808 = vmatpush1.xpose.msra.mxu0 0.0
        %809 = vmatprep.subr.mxu0 0.0
        %810 = vmatpush1.xpose.msra.mxu0 0.0
        %811 = vmatprep.subr.mxu0 0.0
        %812 = vmatpush1.xpose.msra.mxu0 0.0
        %813 = vmatprep.subr.mxu0 0.0
        %814 = vmatpush1.xpose.msra.mxu0 0.0
        %815 = vmatprep.subr.mxu0 0.0
        %816 = vmatpush1.xpose.msra.mxu0 0.0
        %817 = vmatprep.subr.mxu0 0.0
        %818 = vmatpush1.xpose.msra.mxu0 0.0
        %819 = vmatprep.subr.mxu0 0.0
        %820 = vmatpush1.xpose.msra.mxu0 0.0
        %821 = vmatprep.subr.mxu0 0.0
        %822 = vmatpush1.xpose.msra.mxu0 0.0
        %823 = vmatprep.subr.mxu0 0.0
        %824 = vmatpush1.xpose.msra.mxu0 0.0
        %825 = vmatprep.subr.mxu0 0.0
        %826 = vmatpush1.xpose.msra.mxu0 0.0
        %827 = vmatprep.subr.mxu0 0.0
        %828 = vmatpush1.xpose.msra.mxu0 0.0
        %829 = vmatprep.subr.mxu0 0.0
        %830 = vmatpush1.xpose.msra.mxu0 0.0
        %831 = vmatprep.mubr.f32.mxu0 0.0
        %832 = vmatmul.mubr.f32.gmra.mrb[0].mxu0 %v765
        %v833 = vpop.f32.mrb[0].mxu0
        %v834 = vadd.f32 0.0, %v833
        %v835 = vpop.f32.mrb[0].mxu0
        %836 = vdwg.mxu0
        %v837 = vadd.f32 %v735, %v834
        %v838 = vld [vmem:[%s176 + $0x6] sm:$0x1]
        %v839 = vld [vmem:[%s176 + $0xe] sm:$0x1]
        %v840 = vld [vmem:[%s176 + $0x16] sm:$0x1]
        %v841 = vld [vmem:[%s176 + $0x1e] sm:$0x1]
        %v842 = vld [vmem:[%s176 + $0x26] sm:$0x1]
        %v843 = vld [vmem:[%s176 + $0x2e] sm:$0x1]
        %v844 = vld [vmem:[%s176 + $0x36] sm:$0x1]
        %v845 = vld [vmem:[%s176 + $0x3e] sm:$0x1]
        %v854 = vrot.slane %v839, 7
        %v855 = vsel %vm236, %v854, %v838
        %v856 = vrot.slane %v840, 6
        %v857 = vsel %vm239, %v856, %v855
        %v858 = vrot.slane %v841, 5
        %v859 = vsel %vm242, %v858, %v857
        %v860 = vrot.slane %v842, 4
        %v861 = vsel %vm245, %v860, %v859
        %v862 = vrot.slane %v843, 3
        %v863 = vsel %vm248, %v862, %v861
        %v864 = vrot.slane %v844, 2
        %v865 = vsel %vm251, %v864, %v863
        %v866 = vrot.slane %v845, 1
        %v867 = vsel %vm254, %v866, %v865
        %869 = vmatprep.subr.mxu0 0.0
        %870 = vmatpush1.xpose.msra.mxu0 %v867
        %871 = vmatprep.subr.mxu0 0.0
        %872 = vmatpush1.xpose.msra.mxu0 0.0
        %873 = vmatprep.subr.mxu0 0.0
        %874 = vmatpush1.xpose.msra.mxu0 0.0
        %875 = vmatprep.subr.mxu0 0.0
        %876 = vmatpush1.xpose.msra.mxu0 0.0
        %877 = vmatprep.subr.mxu0 0.0
        %878 = vmatpush1.xpose.msra.mxu0 0.0
        %879 = vmatprep.subr.mxu0 0.0
        %880 = vmatpush1.xpose.msra.mxu0 0.0
        %881 = vmatprep.subr.mxu0 0.0
        %882 = vmatpush1.xpose.msra.mxu0 0.0
        %883 = vmatprep.subr.mxu0 0.0
        %884 = vmatpush1.xpose.msra.mxu0 0.0
        %885 = vmatprep.subr.mxu0 0.0
        %886 = vmatpush1.xpose.msra.mxu0 0.0
        %887 = vmatprep.subr.mxu0 0.0
        %888 = vmatpush1.xpose.msra.mxu0 0.0
        %889 = vmatprep.subr.mxu0 0.0
        %890 = vmatpush1.xpose.msra.mxu0 0.0
        %891 = vmatprep.subr.mxu0 0.0
        %892 = vmatpush1.xpose.msra.mxu0 0.0
        %893 = vmatprep.subr.mxu0 0.0
        %894 = vmatpush1.xpose.msra.mxu0 0.0
        %895 = vmatprep.subr.mxu0 0.0
        %896 = vmatpush1.xpose.msra.mxu0 0.0
        %897 = vmatprep.subr.mxu0 0.0
        %898 = vmatpush1.xpose.msra.mxu0 0.0
        %899 = vmatprep.subr.mxu0 0.0
        %900 = vmatpush1.xpose.msra.mxu0 0.0
        %901 = vmatprep.subr.mxu0 0.0
        %902 = vmatpush1.xpose.msra.mxu0 0.0
        %903 = vmatprep.subr.mxu0 0.0
        %904 = vmatpush1.xpose.msra.mxu0 0.0
        %905 = vmatprep.subr.mxu0 0.0
        %906 = vmatpush1.xpose.msra.mxu0 0.0
        %907 = vmatprep.subr.mxu0 0.0
        %908 = vmatpush1.xpose.msra.mxu0 0.0
        %909 = vmatprep.subr.mxu0 0.0
        %910 = vmatpush1.xpose.msra.mxu0 0.0
        %911 = vmatprep.subr.mxu0 0.0
        %912 = vmatpush1.xpose.msra.mxu0 0.0
        %913 = vmatprep.subr.mxu0 0.0
        %914 = vmatpush1.xpose.msra.mxu0 0.0
        %915 = vmatprep.subr.mxu0 0.0
        %916 = vmatpush1.xpose.msra.mxu0 0.0
        %917 = vmatprep.subr.mxu0 0.0
        %918 = vmatpush1.xpose.msra.mxu0 0.0
        %919 = vmatprep.subr.mxu0 0.0
        %920 = vmatpush1.xpose.msra.mxu0 0.0
        %921 = vmatprep.subr.mxu0 0.0
        %922 = vmatpush1.xpose.msra.mxu0 0.0
        %923 = vmatprep.subr.mxu0 0.0
        %924 = vmatpush1.xpose.msra.mxu0 0.0
        %925 = vmatprep.subr.mxu0 0.0
        %926 = vmatpush1.xpose.msra.mxu0 0.0
        %927 = vmatprep.subr.mxu0 0.0
        %928 = vmatpush1.xpose.msra.mxu0 0.0
        %929 = vmatprep.subr.mxu0 0.0
        %930 = vmatpush1.xpose.msra.mxu0 0.0
        %931 = vmatprep.subr.mxu0 0.0
        %932 = vmatpush1.xpose.msra.mxu0 0.0
        %933 = vmatprep.mubr.f32.mxu0 0.0
        %934 = vmatmul.mubr.f32.gmra.mrb[0].mxu0 %v867
        %v935 = vpop.f32.mrb[0].mxu0
        %v936 = vadd.f32 0.0, %v935
        %v937 = vpop.f32.mrb[0].mxu0
        %938 = vdwg.mxu0
        %v939 = vadd.f32 %v837, %v936
        %v940 = vld [vmem:[%s176 + $0x7] sm:$0x1]
        %v941 = vld [vmem:[%s176 + $0xf] sm:$0x1]
        %v942 = vld [vmem:[%s176 + $0x17] sm:$0x1]
        %v943 = vld [vmem:[%s176 + $0x1f] sm:$0x1]
        %v944 = vld [vmem:[%s176 + $0x27] sm:$0x1]
        %v945 = vld [vmem:[%s176 + $0x2f] sm:$0x1]
        %v946 = vld [vmem:[%s176 + $0x37] sm:$0x1]
        %v947 = vld [vmem:[%s176 + $0x3f] sm:$0x1]
        %v956 = vrot.slane %v941, 7
        %v957 = vsel %vm236, %v956, %v940
        %v958 = vrot.slane %v942, 6
        %v959 = vsel %vm239, %v958, %v957
        %v960 = vrot.slane %v943, 5
        %v961 = vsel %vm242, %v960, %v959
        %v962 = vrot.slane %v944, 4
        %v963 = vsel %vm245, %v962, %v961
        %v964 = vrot.slane %v945, 3
        %v965 = vsel %vm248, %v964, %v963
        %v966 = vrot.slane %v946, 2
        %v967 = vsel %vm251, %v966, %v965
        %v968 = vrot.slane %v947, 1
        %v969 = vsel %vm254, %v968, %v967
        %971 = vmatprep.subr.mxu0 0.0
        %972 = vmatpush1.xpose.msra.mxu0 %v969
        %973 = vmatprep.subr.mxu0 0.0
        %974 = vmatpush1.xpose.msra.mxu0 0.0
        %975 = vmatprep.subr.mxu0 0.0
        %976 = vmatpush1.xpose.msra.mxu0 0.0
        %977 = vmatprep.subr.mxu0 0.0
        %978 = vmatpush1.xpose.msra.mxu0 0.0
        %979 = vmatprep.subr.mxu0 0.0
        %980 = vmatpush1.xpose.msra.mxu0 0.0
        %981 = vmatprep.subr.mxu0 0.0
        %982 = vmatpush1.xpose.msra.mxu0 0.0
        %983 = vmatprep.subr.mxu0 0.0
        %984 = vmatpush1.xpose.msra.mxu0 0.0
        %985 = vmatprep.subr.mxu0 0.0
        %986 = vmatpush1.xpose.msra.mxu0 0.0
        %987 = vmatprep.subr.mxu0 0.0
        %988 = vmatpush1.xpose.msra.mxu0 0.0
        %989 = vmatprep.subr.mxu0 0.0
        %990 = vmatpush1.xpose.msra.mxu0 0.0
        %991 = vmatprep.subr.mxu0 0.0
        %992 = vmatpush1.xpose.msra.mxu0 0.0
        %993 = vmatprep.subr.mxu0 0.0
        %994 = vmatpush1.xpose.msra.mxu0 0.0
        %995 = vmatprep.subr.mxu0 0.0
        %996 = vmatpush1.xpose.msra.mxu0 0.0
        %997 = vmatprep.subr.mxu0 0.0
        %998 = vmatpush1.xpose.msra.mxu0 0.0
        %999 = vmatprep.subr.mxu0 0.0
        %1000 = vmatpush1.xpose.msra.mxu0 0.0
        %1001 = vmatprep.subr.mxu0 0.0
        %1002 = vmatpush1.xpose.msra.mxu0 0.0
        %1003 = vmatprep.subr.mxu0 0.0
        %1004 = vmatpush1.xpose.msra.mxu0 0.0
        %1005 = vmatprep.subr.mxu0 0.0
        %1006 = vmatpush1.xpose.msra.mxu0 0.0
        %1007 = vmatprep.subr.mxu0 0.0
        %1008 = vmatpush1.xpose.msra.mxu0 0.0
        %1009 = vmatprep.subr.mxu0 0.0
        %1010 = vmatpush1.xpose.msra.mxu0 0.0
        %1011 = vmatprep.subr.mxu0 0.0
        %1012 = vmatpush1.xpose.msra.mxu0 0.0
        %1013 = vmatprep.subr.mxu0 0.0
        %1014 = vmatpush1.xpose.msra.mxu0 0.0
        %1015 = vmatprep.subr.mxu0 0.0
        %1016 = vmatpush1.xpose.msra.mxu0 0.0
        %1017 = vmatprep.subr.mxu0 0.0
        %1018 = vmatpush1.xpose.msra.mxu0 0.0
        %1019 = vmatprep.subr.mxu0 0.0
        %1020 = vmatpush1.xpose.msra.mxu0 0.0
        %1021 = vmatprep.subr.mxu0 0.0
        %1022 = vmatpush1.xpose.msra.mxu0 0.0
        %1023 = vmatprep.subr.mxu0 0.0
        %1024 = vmatpush1.xpose.msra.mxu0 0.0
        %1025 = vmatprep.subr.mxu0 0.0
        %1026 = vmatpush1.xpose.msra.mxu0 0.0
        %1027 = vmatprep.subr.mxu0 0.0
        %1028 = vmatpush1.xpose.msra.mxu0 0.0
        %1029 = vmatprep.subr.mxu0 0.0
        %1030 = vmatpush1.xpose.msra.mxu0 0.0
        %1031 = vmatprep.subr.mxu0 0.0
        %1032 = vmatpush1.xpose.msra.mxu0 0.0
        %1033 = vmatprep.subr.mxu0 0.0
        %1034 = vmatpush1.xpose.msra.mxu0 0.0
        %1035 = vmatprep.mubr.f32.mxu0 0.0
        %1036 = vmatmul.mubr.f32.gmra.mrb[0].mxu0 %v969
        %v1037 = vpop.f32.mrb[0].mxu0
        %v1038 = vadd.f32 0.0, %v1037
        %v1039 = vpop.f32.mrb[0].mxu0
        %1040 = vdwg.mxu0
        %v1041 = vadd.f32 %v939, %v1038
        %vm1042 = vcmask 64512
        %1043 = vst.msk [vmem:[#allocation2] sm:$0xff] %vm1042, %v1041
        // Predicated region
        $region41: #{_style_loss_forward.1} parent=27 // pred_check
          %p1044 = pneg %p212
        $region42: #{_style_loss_forward.1} parent=27 // pred_check_branch
          %1046 = sbr.rel (%p1044) target = $region44
        $region43: #{_style_loss_forward.1} parent=27 // pred_region
          %v1047 = vld [vmem:[#allocation2] sm:$0xff]
          %v1048 = vmul.f32 %v1047, 3.0517578e-05
          %v1049 = vld [vmem:[%s185] sm:$0xff]
          %v1050 = vsub.f32 %v1048, %v1049
          %v1051 = vmul.f32 %v1050, %v1050
          %v1052 = vsel %vm1042, %v1051, 0.0
          %1053 = vadd.xlane.f32.xlu0 %v1052
          %v1054 = vpop.xlane.xlu0 %1053
          %v1055 = vrot.slane %v1054, 4
          %v1056 = vadd.f32 %v1054, %v1055
          %v1057 = vrot.slane %v1056, 2
          %v1058 = vadd.f32 %v1056, %v1057
          %v1059 = vrot.slane %v1058, 1
          %v1060 = vadd.f32 %v1058, %v1059
          %s1061 = vtos %v1060
          %v1062 = vstv %s1061
          %vm1063 = vcmask 0
          %1064 = vst.msk [vmem:[%s211] sm:$0x1] %vm1063, %v1062
        $region44: #{_style_loss_forward.1} parent=27 // pred_fallthru
          _
        %p1065 = scmp.lt.s32.totalorder %s23, 1
        %s1066 = scalar_select %p1065, %s23, 1
        %s1067 = scalar_lea.vmem %s2, %s1066
        // Predicated region
        $region45: #{_style_loss_forward.1} parent=27 // pred_check
          %p1068 = pneg %p103
        $region46: #{_style_loss_forward.1} parent=27 // pred_check_branch
          %1070 = sbr.rel (%p1068) target = $region48
        $region47: #{_style_loss_forward.1} parent=27 // pred_region
          _
        $region48: #{_style_loss_forward.1} parent=27 // pred_fallthru
          _
      $region28: #{_style_loss_forward.1} parent=5 // pred_fallthru
        _
      %p1071 = scmp.le.s32.totalorder 2, %s14
      // Predicated region
      $region49: #{_style_loss_forward.1} parent=5 // pred_check
        %p1072 = pneg %p1071
      $region50: #{_style_loss_forward.1} parent=5 // pred_check_branch
        %1074 = sbr.rel (%p1072) target = $region52
      $region51: #{_style_loss_forward.1} parent=5 // pred_region
        %s1075 = ssub.s32 %s14, 2
        // Predicated region
        $region53: #{_style_loss_forward.1} parent=51 // pred_check
          %p1076 = pneg %p109
        $region54: #{_style_loss_forward.1} parent=51 // pred_check_branch
          %1078 = sbr.rel (%p1076) target = $region56
        $region55: #{_style_loss_forward.1} parent=51 // pred_region
          %p1079 = scmp.lt.s32.totalorder %s25, 1
          %s1080 = scalar_select %p1079, %s25, 1
          %s1081 = scalar_lea.vmem %s2, %s1080
        $region56: #{_style_loss_forward.1} parent=51 // pred_fallthru
          _
      $region52: #{_style_loss_forward.1} parent=5 // pred_fallthru
        _
    $region6: #{_style_loss_forward.1} parent=1 // loop_footer
      %s18 = sadd.s32 1, %s14
    $region7: #{_style_loss_forward.1} parent=1 // loop_footer_branch
      %13 = sbr.rel target = $region3
    $region8: #{_style_loss_forward.1} parent=1 // loop_exit
      _
    %1082 = vsyncpa [#allocation4], 1
    %s1083 = scalar_lea.sflag [#allocation4], 1
    %1084 = vsyncpa %s1083, 1
    %1085 = vsyncpa [#allocation6], 1
    %s1086 = scalar_lea.sflag [#allocation6], 1
    %1087 = vsyncpa %s1086, 1

</llo_original>
